<compile_context>
chip_gen: v6e
topology: v6e:2x2x1
jax: 0.10.0
libtpu: 0.0.40
codegen_flags: <defaults>
</compile_context>

<pallas_src>
import jax
import jax.numpy as jnp
from jax.experimental import pallas as pl
from jax.experimental.pallas import tpu as pltpu

BN_EPS = 1e-5
LANES = 128


def _actor_kernel(x_ref, w1_ref, b1_ref, w2_ref, b2_ref, w3_ref, b3_ref, out_ref):
    def batchnorm(h):
        # training-mode BN over the batch axis, biased variance, gamma=1, beta=0
        # single-pass variance: E[x^2] - mean^2 (clamped for fp safety)
        mean = jnp.mean(h, axis=0, keepdims=True)
        ex2 = jnp.mean(h * h, axis=0, keepdims=True)
        var = jnp.maximum(ex2 - mean * mean, 0.0)
        return (h - mean) * jax.lax.rsqrt(var + BN_EPS)

    # Layer 1: BN(x) -> Linear -> ReLU   (matmul operands bf16, f32 accumulate)
    x = batchnorm(x_ref[...])
    h1 = jnp.dot(x.astype(jnp.bfloat16), w1_ref[...],
                 preferred_element_type=jnp.float32) + b1_ref[...]
    h1 = jnp.maximum(h1, 0.0)

    # Layer 2: BN -> Linear -> ReLU
    h1 = batchnorm(h1)
    h2 = jnp.dot(h1.astype(jnp.bfloat16), w2_ref[...],
                 preferred_element_type=jnp.float32) + b2_ref[...]
    h2 = jnp.maximum(h2, 0.0)

    # Layer 3: BN -> Linear -> Tanh
    h2 = batchnorm(h2)
    h3 = jnp.dot(h2.astype(jnp.bfloat16), w3_ref[...],
                 preferred_element_type=jnp.float32) + b3_ref[...]
    out_ref[...] = jnp.tanh(h3)


def _pad_axis(x, axis, mult):
    n = x.shape[axis]
    pad = (-n) % mult
    if pad == 0:
        return x
    widths = [(0, 0)] * x.ndim
    widths[axis] = (0, pad)
    return jnp.pad(x, widths)


def actor_forward(state, params):
    """state: [B, state_size] float32 -> actions [B, action_size] float32."""
    w1, b1, w2, b2, w3, b3 = params
    B, S = state.shape
    A = w3.shape[1]

    # Zero-pad every feature dim up to a multiple of 128 lanes (exactness of
    # zero padding through BN/ReLU/matmul is preserved; see header comment).
    # Batch is NOT padded — that would change the BN statistics.
    x_p = _pad_axis(state, 1, LANES)

    w1_p = _pad_axis(_pad_axis(w1, 0, LANES), 1, LANES).astype(jnp.bfloat16)
    w2_p = _pad_axis(_pad_axis(w2, 0, LANES), 1, LANES).astype(jnp.bfloat16)
    w3_p = _pad_axis(_pad_axis(w3, 0, LANES), 1, LANES).astype(jnp.bfloat16)

    b1_p = _pad_axis(b1, 1, LANES)  # biases stay f32 (single vreg each)
    b2_p = _pad_axis(b2, 1, LANES)
    b3_p = _pad_axis(b3, 1, LANES)

    A_pad = w3_p.shape[1]

    vmem = pl.BlockSpec(memory_space=pltpu.MemorySpace.VMEM)
    out_p = pl.pallas_call(
        _actor_kernel,
        out_shape=jax.ShapeDtypeStruct((B, A_pad), jnp.float32),
        in_specs=[vmem] * 7,
        out_specs=vmem,
    )(x_p, w1_p, b1_p, w2_p, b2_p, w3_p, b3_p)

    # slice the lane-dense padded output back to the real action dim
    return out_p[:, :A]


def init_actor_params(key, state_size, action_size, fc1_units=128, fc2_units=128):
    """Deterministic init matching the PyTorch module: xavier_uniform_ weights,
    biases filled with 0.1. Weights stored as [in, out], kept in f32 here;
    actor_forward casts them to bf16 for the MXU."""
    def xavier(key, fan_in, fan_out):
        limit = jnp.sqrt(6.0 / (fan_in + fan_out))
        return jax.random.uniform(
            key, (fan_in, fan_out), jnp.float32, minval=-limit, maxval=limit
        )

    k1, k2, k3 = jax.random.split(key, 3)
    w1 = xavier(k1, state_size, fc1_units)
    b1 = jnp.full((1, fc1_units), 0.1, jnp.float32)
    w2 = xavier(k2, fc1_units, fc2_units)
    b2 = jnp.full((1, fc2_units), 0.1, jnp.float32)
    w3 = xavier(k3, fc2_units, action_size)
    b3 = jnp.full((1, action_size), 0.1, jnp.float32)
    return (w1, b1, w2, b2, w3, b3)


def _reference_forward(state, params):
    """Pure-JAX f32 reference of the same forward pass (for a sanity check)."""
    w1, b1, w2, b2, w3, b3 = params

    def bn(h):
        mean = jnp.mean(h, axis=0, keepdims=True)
        var = jnp.mean((h - mean) ** 2, axis=0, keepdims=True)
        return (h - mean) / jnp.sqrt(var + BN_EPS)

    h = bn(state)
    h = jnp.maximum(h @ w1 + b1, 0.0)
    h = bn(h)
    h = jnp.maximum(h @ w2 + b2, 0.0)
    h = bn(h)
    return jnp.tanh(h @ w3 + b3)


if __name__ == "__main__":
    state_size = 32
    action_size = 8
    batch = 8

    key = jax.random.PRNGKey(0)
    k_params, k_state = jax.random.split(key)

    params = init_actor_params(k_params, state_size, action_size)
    state = jax.random.normal(k_state, (batch, state_size), jnp.float32)

    out = actor_forward(state, params)
    out = jax.block_until_ready(out)

    ref = _reference_forward(state, params)
    assert out.shape == (batch, action_size)
    # bf16 matmul operands (f32 accumulation) vs. pure-f32 reference:
    # allow a loose tolerance; outputs are tanh-bounded in [-1, 1].
    assert jnp.allclose(out, ref, atol=5e-2, rtol=0.0), (
        float(jnp.max(jnp.abs(out - ref)))
    )

    print("KERNEL_OK")
</pallas_src>

<mosaic_0001>
module attributes {stable_mosaic.version = 11 : i64} {
  func.func @_actor_kernel(%arg0: memref<8x128xf32, #tpu.memory_space<vmem>>, %arg1: memref<128x128xbf16, #tpu.memory_space<vmem>>, %arg2: memref<1x128xf32, #tpu.memory_space<vmem>>, %arg3: memref<128x128xbf16, #tpu.memory_space<vmem>>, %arg4: memref<1x128xf32, #tpu.memory_space<vmem>>, %arg5: memref<128x128xbf16, #tpu.memory_space<vmem>>, %arg6: memref<1x128xf32, #tpu.memory_space<vmem>>, %arg7: memref<8x128xf32, #tpu.memory_space<vmem>>) attributes {dimension_semantics = [], scalar_prefetch = 0 : i64, scratch_operands = 0 : i64, tpu.core_type = #tpu.core_type<tc>} {
    %c0 = arith.constant 0 : index
    %c0_0 = arith.constant 0 : index
    %0 = vector.load %arg0[%c0, %c0_0] : memref<8x128xf32, #tpu.memory_space<vmem>>, vector<8x128xf32>
    %cst = arith.constant dense<0.000000e+00> : vector<128xf32>
    %1 = vector.multi_reduction <add>, %0, %cst [0] : vector<8x128xf32> to vector<128xf32>
    %2 = vector.shape_cast %1 : vector<128xf32> to vector<1x128xf32>
    %cst_1 = arith.constant 8.000000e+00 : f32
    %3 = vector.broadcast %cst_1 : f32 to vector<1x128xf32>
    %4 = arith.divf %2, %3 : vector<1x128xf32>
    %5 = arith.mulf %0, %0 : vector<8x128xf32>
    %cst_2 = arith.constant dense<0.000000e+00> : vector<128xf32>
    %6 = vector.multi_reduction <add>, %5, %cst_2 [0] : vector<8x128xf32> to vector<128xf32>
    %7 = vector.shape_cast %6 : vector<128xf32> to vector<1x128xf32>
    %cst_3 = arith.constant 8.000000e+00 : f32
    %8 = vector.broadcast %cst_3 : f32 to vector<1x128xf32>
    %9 = arith.divf %7, %8 : vector<1x128xf32>
    %10 = arith.mulf %4, %4 : vector<1x128xf32>
    %11 = arith.subf %9, %10 : vector<1x128xf32>
    %cst_4 = arith.constant 0.000000e+00 : f32
    %12 = vector.broadcast %cst_4 : f32 to vector<1x128xf32>
    %13 = arith.maximumf %11, %12 : vector<1x128xf32>
    %14 = vector.broadcast %4 : vector<1x128xf32> to vector<8x128xf32>
    %15 = arith.subf %0, %14 : vector<8x128xf32>
    %cst_5 = arith.constant 9.99999974E-6 : f32
    %16 = vector.broadcast %cst_5 : f32 to vector<1x128xf32>
    %17 = arith.addf %13, %16 : vector<1x128xf32>
    %18 = math.rsqrt %17 : vector<1x128xf32>
    %19 = vector.broadcast %18 : vector<1x128xf32> to vector<8x128xf32>
    %20 = arith.mulf %15, %19 : vector<8x128xf32>
    %21 = arith.truncf %20 : vector<8x128xf32> to vector<8x128xbf16>
    %c0_6 = arith.constant 0 : index
    %c0_7 = arith.constant 0 : index
    %22 = vector.load %arg1[%c0_6, %c0_7] : memref<128x128xbf16, #tpu.memory_space<vmem>>, vector<128x128xbf16>
    %cst_8 = arith.constant dense<0.000000e+00> : vector<8x128xf32>
    %23 = tpu.matmul %21, %22, %cst_8 {dimension_numbers = #tpu.dot_dimension_numbers<[1], [0], [0], [1], [0, 0, 1, 1], [], []>} : vector<8x128xbf16>, vector<128x128xbf16>, vector<8x128xf32> -> vector<8x128xf32>
    %c0_9 = arith.constant 0 : index
    %c0_10 = arith.constant 0 : index
    %24 = vector.load %arg2[%c0_9, %c0_10] : memref<1x128xf32, #tpu.memory_space<vmem>>, vector<1x128xf32>
    %25 = vector.broadcast %24 : vector<1x128xf32> to vector<8x128xf32>
    %26 = arith.addf %23, %25 : vector<8x128xf32>
    %cst_11 = arith.constant 0.000000e+00 : f32
    %27 = vector.broadcast %cst_11 : f32 to vector<8x128xf32>
    %28 = arith.maximumf %26, %27 : vector<8x128xf32>
    %cst_12 = arith.constant dense<0.000000e+00> : vector<128xf32>
    %29 = vector.multi_reduction <add>, %28, %cst_12 [0] : vector<8x128xf32> to vector<128xf32>
    %30 = vector.shape_cast %29 : vector<128xf32> to vector<1x128xf32>
    %cst_13 = arith.constant 8.000000e+00 : f32
    %31 = vector.broadcast %cst_13 : f32 to vector<1x128xf32>
    %32 = arith.divf %30, %31 : vector<1x128xf32>
    %33 = arith.mulf %28, %28 : vector<8x128xf32>
    %cst_14 = arith.constant dense<0.000000e+00> : vector<128xf32>
    %34 = vector.multi_reduction <add>, %33, %cst_14 [0] : vector<8x128xf32> to vector<128xf32>
    %35 = vector.shape_cast %34 : vector<128xf32> to vector<1x128xf32>
    %cst_15 = arith.constant 8.000000e+00 : f32
    %36 = vector.broadcast %cst_15 : f32 to vector<1x128xf32>
    %37 = arith.divf %35, %36 : vector<1x128xf32>
    %38 = arith.mulf %32, %32 : vector<1x128xf32>
    %39 = arith.subf %37, %38 : vector<1x128xf32>
    %cst_16 = arith.constant 0.000000e+00 : f32
    %40 = vector.broadcast %cst_16 : f32 to vector<1x128xf32>
    %41 = arith.maximumf %39, %40 : vector<1x128xf32>
    %42 = vector.broadcast %32 : vector<1x128xf32> to vector<8x128xf32>
    %43 = arith.subf %28, %42 : vector<8x128xf32>
    %cst_17 = arith.constant 9.99999974E-6 : f32
    %44 = vector.broadcast %cst_17 : f32 to vector<1x128xf32>
    %45 = arith.addf %41, %44 : vector<1x128xf32>
    %46 = math.rsqrt %45 : vector<1x128xf32>
    %47 = vector.broadcast %46 : vector<1x128xf32> to vector<8x128xf32>
    %48 = arith.mulf %43, %47 : vector<8x128xf32>
    %49 = arith.truncf %48 : vector<8x128xf32> to vector<8x128xbf16>
    %c0_18 = arith.constant 0 : index
    %c0_19 = arith.constant 0 : index
    %50 = vector.load %arg3[%c0_18, %c0_19] : memref<128x128xbf16, #tpu.memory_space<vmem>>, vector<128x128xbf16>
    %cst_20 = arith.constant dense<0.000000e+00> : vector<8x128xf32>
    %51 = tpu.matmul %49, %50, %cst_20 {dimension_numbers = #tpu.dot_dimension_numbers<[1], [0], [0], [1], [0, 0, 1, 1], [], []>} : vector<8x128xbf16>, vector<128x128xbf16>, vector<8x128xf32> -> vector<8x128xf32>
    %c0_21 = arith.constant 0 : index
    %c0_22 = arith.constant 0 : index
    %52 = vector.load %arg4[%c0_21, %c0_22] : memref<1x128xf32, #tpu.memory_space<vmem>>, vector<1x128xf32>
    %53 = vector.broadcast %52 : vector<1x128xf32> to vector<8x128xf32>
    %54 = arith.addf %51, %53 : vector<8x128xf32>
    %cst_23 = arith.constant 0.000000e+00 : f32
    %55 = vector.broadcast %cst_23 : f32 to vector<8x128xf32>
    %56 = arith.maximumf %54, %55 : vector<8x128xf32>
    %cst_24 = arith.constant dense<0.000000e+00> : vector<128xf32>
    %57 = vector.multi_reduction <add>, %56, %cst_24 [0] : vector<8x128xf32> to vector<128xf32>
    %58 = vector.shape_cast %57 : vector<128xf32> to vector<1x128xf32>
    %cst_25 = arith.constant 8.000000e+00 : f32
    %59 = vector.broadcast %cst_25 : f32 to vector<1x128xf32>
    %60 = arith.divf %58, %59 : vector<1x128xf32>
    %61 = arith.mulf %56, %56 : vector<8x128xf32>
    %cst_26 = arith.constant dense<0.000000e+00> : vector<128xf32>
    %62 = vector.multi_reduction <add>, %61, %cst_26 [0] : vector<8x128xf32> to vector<128xf32>
    %63 = vector.shape_cast %62 : vector<128xf32> to vector<1x128xf32>
    %cst_27 = arith.constant 8.000000e+00 : f32
    %64 = vector.broadcast %cst_27 : f32 to vector<1x128xf32>
    %65 = arith.divf %63, %64 : vector<1x128xf32>
    %66 = arith.mulf %60, %60 : vector<1x128xf32>
    %67 = arith.subf %65, %66 : vector<1x128xf32>
    %cst_28 = arith.constant 0.000000e+00 : f32
    %68 = vector.broadcast %cst_28 : f32 to vector<1x128xf32>
    %69 = arith.maximumf %67, %68 : vector<1x128xf32>
    %70 = vector.broadcast %60 : vector<1x128xf32> to vector<8x128xf32>
    %71 = arith.subf %56, %70 : vector<8x128xf32>
    %cst_29 = arith.constant 9.99999974E-6 : f32
    %72 = vector.broadcast %cst_29 : f32 to vector<1x128xf32>
    %73 = arith.addf %69, %72 : vector<1x128xf32>
    %74 = math.rsqrt %73 : vector<1x128xf32>
    %75 = vector.broadcast %74 : vector<1x128xf32> to vector<8x128xf32>
    %76 = arith.mulf %71, %75 : vector<8x128xf32>
    %77 = arith.truncf %76 : vector<8x128xf32> to vector<8x128xbf16>
    %c0_30 = arith.constant 0 : index
    %c0_31 = arith.constant 0 : index
    %78 = vector.load %arg5[%c0_30, %c0_31] : memref<128x128xbf16, #tpu.memory_space<vmem>>, vector<128x128xbf16>
    %cst_32 = arith.constant dense<0.000000e+00> : vector<8x128xf32>
    %79 = tpu.matmul %77, %78, %cst_32 {dimension_numbers = #tpu.dot_dimension_numbers<[1], [0], [0], [1], [0, 0, 1, 1], [], []>} : vector<8x128xbf16>, vector<128x128xbf16>, vector<8x128xf32> -> vector<8x128xf32>
    %c0_33 = arith.constant 0 : index
    %c0_34 = arith.constant 0 : index
    %80 = vector.load %arg6[%c0_33, %c0_34] : memref<1x128xf32, #tpu.memory_space<vmem>>, vector<1x128xf32>
    %81 = vector.broadcast %80 : vector<1x128xf32> to vector<8x128xf32>
    %82 = arith.addf %79, %81 : vector<8x128xf32>
    %83 = math.tanh %82 : vector<8x128xf32>
    %c0_35 = arith.constant 0 : index
    %c0_36 = arith.constant 0 : index
    %84 = vector.load %arg7[%c0_35, %c0_36] : memref<8x128xf32, #tpu.memory_space<vmem>>, vector<8x128xf32>
    tpu.vector_store %arg7[%c0_35, %c0_36], %83 {strides = array<i32>} : memref<8x128xf32, #tpu.memory_space<vmem>>, vector<8x128xf32>,
    return
  }
}

</mosaic_0001>

<llo_original>
// kernel: tpu_custom_call.1
$region0: #{tpu_custom_call.1}
  #allocation0 [shape = 'u32[]', space=smem, size = 0x4, offset = 0x4, fixed_abs, tag = 'smem constant byte address 0x4 - core index']
  #allocation1 [shape = 'u32[144,128]{1,0:T(1,128)}', space=vmem, size = 0x12000, scoped, tag = 'internal scratch']
  %s0 = inlined_call_operand.hbm [shape: f32[8,128], index: 0, kind: input, shape index: {}]
  %s1 = inlined_call_operand.hbm [shape: bf16[128,128], index: 1, kind: input, shape index: {}]
  %s2 = inlined_call_operand.vmem [shape: f32[1,128], index: 2, kind: input, shape index: {}]
  %s3 = inlined_call_operand.hbm [shape: bf16[128,128], index: 3, kind: input, shape index: {}]
  %s4 = inlined_call_operand.vmem [shape: f32[1,128], index: 4, kind: input, shape index: {}]
  %s5 = inlined_call_operand.hbm [shape: bf16[128,128], index: 5, kind: input, shape index: {}]
  %s6 = inlined_call_operand.vmem [shape: f32[1,128], index: 6, kind: input, shape index: {}]
  %s7 = inlined_call_operand.hbm [shape: f32[8,128], index: 7, kind: output, shape index: {}]
  %s8 = sld [smem:[#allocation0]]
  $region54: #{tpu_custom_call.1} parent=0
    _
  %s10 = ssub.s32 1, %s8
  %s11 = scalar_select 0, %s10, %s8
  $region1: #{tpu_custom_call.1} parent=0
    #allocation2 [shape = 'u8[4096]{0}', space=vmem, size = 0x1000, scoped, tag = 'input window, operand 0, single buffered']
    #allocation3 [shape = 's32[1]{0}', space=sflag, size = 0x4, scoped, tag = 'scoped memory for tpu_custom_call.1']
    #allocation4 [shape = 's32[1]{0}', space=sflag, size = 0x4, scoped, tag = 'scoped memory for tpu_custom_call.1']
    #allocation5 [shape = 'u8[32768]{0}', space=vmem, size = 0x8000, scoped, tag = 'input window, operand 1, single buffered']
    #allocation6 [shape = 's32[1]{0}', space=sflag, size = 0x4, scoped, tag = 'scoped memory for tpu_custom_call.1']
    #allocation7 [shape = 'u8[32768]{0}', space=vmem, size = 0x8000, scoped, tag = 'input window, operand 3, single buffered']
    #allocation8 [shape = 'u8[32768]{0}', space=vmem, size = 0x8000, scoped, tag = 'input window, operand 5, single buffered']
    #allocation9 [shape = 's32[1]{0}', space=sflag, size = 0x4, scoped, tag = 'scoped memory for tpu_custom_call.1']
    #allocation10 [shape = 'u8[4096]{0}', space=vmem, size = 0x1000, scoped, tag = 'output window, operand 0, single buffered']
    %12 = vsyncpa [#allocation3], 0
    %13 = vsyncpa [#allocation6], 0
    %14 = vsyncpa [#allocation9], 0
    %15 = vsyncpa [#allocation4], 0
    // Predicated region
    $region2: #{tpu_custom_call.1} parent=1 // pred_check
      _
    $region3: #{tpu_custom_call.1} parent=1 // pred_check_branch
      %17 = sbr.rel (0) target = $region5
    $region4: #{tpu_custom_call.1} parent=1 // pred_region
      %s19 = ssub.s32 128, 128
      %20 = vsyncadd [#allocation3], %s19
      %s22 = sshll.u32 [#allocation2], 4
      %s23 = int_to_ptr.vmem [resolvable:$true] %s22
      %25 = dma.hbm_to_vmem [thread:$0]  %s0, 128, %s23, [#allocation3]
    $region5: #{tpu_custom_call.1} parent=1 // pred_fallthru
      _
    // Predicated region
    $region6: #{tpu_custom_call.1} parent=1 // pred_check
      _
    $region7: #{tpu_custom_call.1} parent=1 // pred_check_branch
      %27 = sbr.rel (0) target = $region9
    $region8: #{tpu_custom_call.1} parent=1 // pred_region
      %s29 = ssub.s32 1024, 1024
      %30 = vsyncadd [#allocation6], %s29
      %s31 = sshll.u32 [#allocation5], 4
      %s32 = int_to_ptr.vmem [resolvable:$true] %s31
      %37 = dma.hbm_to_vmem [thread:$0]  %s1, 1024, %s32, [#allocation6], 64, 64, 4
    $region9: #{tpu_custom_call.1} parent=1 // pred_fallthru
      _
    // Predicated region
    $region10: #{tpu_custom_call.1} parent=1 // pred_check
      _
    $region11: #{tpu_custom_call.1} parent=1 // pred_check_branch
      %39 = sbr.rel (0) target = $region13
    $region12: #{tpu_custom_call.1} parent=1 // pred_region
      _
    $region13: #{tpu_custom_call.1} parent=1 // pred_fallthru
      _
    // Predicated region
    $region14: #{tpu_custom_call.1} parent=1 // pred_check
      _
    $region15: #{tpu_custom_call.1} parent=1 // pred_check_branch
      %41 = sbr.rel (0) target = $region17
    $region16: #{tpu_custom_call.1} parent=1 // pred_region
      %s43 = ssub.s32 1024, 1024
      %44 = vsyncadd [#allocation6], %s43
      %s45 = sshll.u32 [#allocation7], 4
      %s46 = int_to_ptr.vmem [resolvable:$true] %s45
      %51 = dma.hbm_to_vmem [thread:$0]  %s3, 1024, %s46, [#allocation6], 64, 64, 4
    $region17: #{tpu_custom_call.1} parent=1 // pred_fallthru
      _
    // Predicated region
    $region18: #{tpu_custom_call.1} parent=1 // pred_check
      _
    $region19: #{tpu_custom_call.1} parent=1 // pred_check_branch
      %53 = sbr.rel (0) target = $region21
    $region20: #{tpu_custom_call.1} parent=1 // pred_region
      _
    $region21: #{tpu_custom_call.1} parent=1 // pred_fallthru
      _
    // Predicated region
    $region22: #{tpu_custom_call.1} parent=1 // pred_check
      _
    $region23: #{tpu_custom_call.1} parent=1 // pred_check_branch
      %55 = sbr.rel (0) target = $region25
    $region24: #{tpu_custom_call.1} parent=1 // pred_region
      %s57 = ssub.s32 1024, 1024
      %58 = vsyncadd [#allocation9], %s57
      %s59 = sshll.u32 [#allocation8], 4
      %s60 = int_to_ptr.vmem [resolvable:$true] %s59
      %65 = dma.hbm_to_vmem [thread:$0]  %s5, 1024, %s60, [#allocation9], 64, 64, 4
    $region25: #{tpu_custom_call.1} parent=1 // pred_fallthru
      _
    // Predicated region
    $region26: #{tpu_custom_call.1} parent=1 // pred_check
      _
    $region27: #{tpu_custom_call.1} parent=1 // pred_check_branch
      %67 = sbr.rel (0) target = $region29
    $region28: #{tpu_custom_call.1} parent=1 // pred_region
      _
    $region29: #{tpu_custom_call.1} parent=1 // pred_fallthru
      _
    // Predicated region
    $region30: #{tpu_custom_call.1} parent=1 // pred_check
      _
    $region31: #{tpu_custom_call.1} parent=1 // pred_check_branch
      %69 = sbr.rel (0) target = $region33
    $region32: #{tpu_custom_call.1} parent=1 // pred_region
      %70 = dma.done [#allocation3], 128
    $region33: #{tpu_custom_call.1} parent=1 // pred_fallthru
      _
    // Predicated region
    $region34: #{tpu_custom_call.1} parent=1 // pred_check
      _
    $region35: #{tpu_custom_call.1} parent=1 // pred_check_branch
      %72 = sbr.rel (0) target = $region37
    $region36: #{tpu_custom_call.1} parent=1 // pred_region
      %73 = dma.done [#allocation6], 1024
    $region37: #{tpu_custom_call.1} parent=1 // pred_fallthru
      _
    // Predicated region
    $region38: #{tpu_custom_call.1} parent=1 // pred_check
      _
    $region39: #{tpu_custom_call.1} parent=1 // pred_check_branch
      %75 = sbr.rel (0) target = $region41
    $region40: #{tpu_custom_call.1} parent=1 // pred_region
      %76 = dma.done [#allocation6], 1024
    $region41: #{tpu_custom_call.1} parent=1 // pred_fallthru
      _
    // Predicated region
    $region42: #{tpu_custom_call.1} parent=1 // pred_check
      _
    $region43: #{tpu_custom_call.1} parent=1 // pred_check_branch
      %78 = sbr.rel (0) target = $region45
    $region44: #{tpu_custom_call.1} parent=1 // pred_region
      %79 = dma.done [#allocation9], 1024
    $region45: #{tpu_custom_call.1} parent=1 // pred_fallthru
      _
    %v81 = vld [vmem:[#allocation2] sm:$0xff]
    %v82 = vrot.slane %v81, 4
    %v83 = vadd.f32 %v81, %v82
    %v84 = vrot.slane %v83, 2
    %v85 = vadd.f32 %v83, %v84
    %v86 = vrot.slane %v85, 1
    %v87 = vadd.f32 %v85, %v86
    %v88 = vrcp.pop 8.0
    %v89 = vmul.f32 %v87, %v88
    %v90 = vmul.f32 %v81, %v81
    %v91 = vrot.slane %v90, 4
    %v92 = vadd.f32 %v90, %v91
    %v93 = vrot.slane %v92, 2
    %v94 = vadd.f32 %v92, %v93
    %v95 = vrot.slane %v94, 1
    %v96 = vadd.f32 %v94, %v95
    %v97 = vmul.f32 %v96, %v88
    %v98 = vmul.f32 %v89, %v89
    %v99 = vsub.f32 %v97, %v98
    %v100 = vmax.f32 %v99, 0.0
    %v101 = vsub.f32 %v81, %v89
    %v102 = vadd.f32 %v100, 1e-05
    %v103 = vrsqrt.pop %v102
    %v104 = vmul.f32 %v101, %v103
    %v105 = vpack.c.bf16 %v104, %v104
    %v106 = vld [vmem:[#allocation5] sm:$0xf]
    %v107 = vld [vmem:[#allocation5 + $0x4] sm:$0xf]
    %v108 = vld [vmem:[#allocation5 + $0x8] sm:$0xf]
    %v109 = vld [vmem:[#allocation5 + $0xc] sm:$0xf]
    %v110 = vld [vmem:[#allocation5 + $0x10] sm:$0xf]
    %v111 = vld [vmem:[#allocation5 + $0x14] sm:$0xf]
    %v112 = vld [vmem:[#allocation5 + $0x18] sm:$0xf]
    %v113 = vld [vmem:[#allocation5 + $0x1c] sm:$0xf]
    %v114 = vld [vmem:[#allocation5 + $0x20] sm:$0xf]
    %v115 = vld [vmem:[#allocation5 + $0x24] sm:$0xf]
    %v116 = vld [vmem:[#allocation5 + $0x28] sm:$0xf]
    %v117 = vld [vmem:[#allocation5 + $0x2c] sm:$0xf]
    %v118 = vld [vmem:[#allocation5 + $0x30] sm:$0xf]
    %v119 = vld [vmem:[#allocation5 + $0x34] sm:$0xf]
    %v120 = vld [vmem:[#allocation5 + $0x38] sm:$0xf]
    %v121 = vld [vmem:[#allocation5 + $0x3c] sm:$0xf]
    %v122 = vld [vmem:[%s2] sm:$0x1]
    %v124 = vlaneseq
    %v125 = vshrl.u32 %v124, 7
    %v126 = vsub.s32 0, %v125
    %v127 = vrot.slane %v122, %v126
    %v145 = vunpack.c.l.b16 %v106
    %v146 = vunpack.c.l.b16 %v107
    %v147 = vunpack.c.l.b16 %v108
    %v148 = vunpack.c.l.b16 %v109
    %v149 = vunpack.c.l.b16 %v110
    %v150 = vunpack.c.l.b16 %v111
    %v151 = vunpack.c.l.b16 %v112
    %v152 = vunpack.c.l.b16 %v113
    %v153 = vunpack.c.l.b16 %v114
    %v154 = vunpack.c.l.b16 %v115
    %v155 = vunpack.c.l.b16 %v116
    %v156 = vunpack.c.l.b16 %v117
    %v157 = vunpack.c.l.b16 %v118
    %v158 = vunpack.c.l.b16 %v119
    %v159 = vunpack.c.l.b16 %v120
    %v160 = vunpack.c.l.b16 %v121
    %v161 = vpack.c.b16 %v146, %v145
    %v162 = vpack.c.b16 %v148, %v147
    %v163 = vpack.c.b16 %v150, %v149
    %v164 = vpack.c.b16 %v152, %v151
    %v165 = vpack.c.b16 %v154, %v153
    %v166 = vpack.c.b16 %v156, %v155
    %v167 = vpack.c.b16 %v158, %v157
    %v168 = vpack.c.b16 %v160, %v159
    %177 = vmatprep.subr.bf16.mxu0 0
    %178 = vmatpush1.bf16.msra.mxu0 %v168
    %179 = vmatprep.subr.bf16.mxu0 0
    %180 = vmatpush1.bf16.msra.mxu0 %v167
    %181 = vmatprep.subr.bf16.mxu0 0
    %182 = vmatpush1.bf16.msra.mxu0 %v166
    %183 = vmatprep.subr.bf16.mxu0 0
    %184 = vmatpush1.bf16.msra.mxu0 %v165
    %185 = vmatprep.subr.bf16.mxu0 0
    %186 = vmatpush1.bf16.msra.mxu0 %v164
    %187 = vmatprep.subr.bf16.mxu0 0
    %188 = vmatpush1.bf16.msra.mxu0 %v163
    %189 = vmatprep.subr.bf16.mxu0 0
    %190 = vmatpush1.bf16.msra.mxu0 %v162
    %191 = vmatprep.subr.bf16.mxu0 0
    %192 = vmatpush1.bf16.msra.mxu0 %v161
    %193 = vmatprep.subr.bf16.mxu0 0
    %194 = vmatpush2.bf16.msra.mxu0 0
    %195 = vmatprep.subr.bf16.mxu0 0
    %196 = vmatpush2.bf16.msra.mxu0 0
    %197 = vmatprep.subr.bf16.mxu0 0
    %198 = vmatpush2.bf16.msra.mxu0 0
    %199 = vmatprep.subr.bf16.mxu0 0
    %200 = vmatpush2.bf16.msra.mxu0 0
    %201 = vmatprep.subr.bf16.mxu0 0
    %202 = vmatpush2.bf16.msra.mxu0 0
    %203 = vmatprep.subr.bf16.mxu0 0
    %204 = vmatpush2.bf16.msra.mxu0 0
    %205 = vmatprep.subr.bf16.mxu0 0
    %206 = vmatpush2.bf16.msra.mxu0 0
    %207 = vmatprep.subr.bf16.mxu0 0
    %208 = vmatpush2.bf16.msra.mxu0 0
    %209 = vmatprep.mubr.bf16.mxu0 0
    %210 = vmatmul.mubr.bf16.gmra.mxu0 %v105
    %v211 = vpop.f32.mrf.mxu0
    %v212 = vadd.f32 %v127, %v211
    %v213 = vpop.f32.mrf.mxu0
    %v214 = vpop.f32.mrf.mxu0
    %v215 = vpop.f32.mrf.mxu0
    %216 = vdwg.mxu0
    %v217 = vmax.f32 %v212, 0.0
    %v218 = vrot.slane %v217, 4
    %v219 = vadd.f32 %v217, %v218
    %v220 = vrot.slane %v219, 2
    %v221 = vadd.f32 %v219, %v220
    %v222 = vrot.slane %v221, 1
    %v223 = vadd.f32 %v221, %v222
    %v224 = vmul.f32 %v223, %v88
    %v225 = vmul.f32 %v217, %v217
    %v226 = vrot.slane %v225, 4
    %v227 = vadd.f32 %v225, %v226
    %v228 = vrot.slane %v227, 2
    %v229 = vadd.f32 %v227, %v228
    %v230 = vrot.slane %v229, 1
    %v231 = vadd.f32 %v229, %v230
    %v232 = vmul.f32 %v231, %v88
    %v233 = vmul.f32 %v224, %v224
    %v234 = vsub.f32 %v232, %v233
    %v235 = vmax.f32 %v234, 0.0
    %v236 = vsub.f32 %v217, %v224
    %v237 = vadd.f32 %v235, 1e-05
    %v238 = vrsqrt.pop %v237
    %v239 = vmul.f32 %v236, %v238
    %v240 = vpack.c.bf16 %v239, %v239
    %v241 = vld [vmem:[#allocation7] sm:$0xf]
    %v242 = vld [vmem:[#allocation7 + $0x4] sm:$0xf]
    %v243 = vld [vmem:[#allocation7 + $0x8] sm:$0xf]
    %v244 = vld [vmem:[#allocation7 + $0xc] sm:$0xf]
    %v245 = vld [vmem:[#allocation7 + $0x10] sm:$0xf]
    %v246 = vld [vmem:[#allocation7 + $0x14] sm:$0xf]
    %v247 = vld [vmem:[#allocation7 + $0x18] sm:$0xf]
    %v248 = vld [vmem:[#allocation7 + $0x1c] sm:$0xf]
    %v249 = vld [vmem:[#allocation7 + $0x20] sm:$0xf]
    %v250 = vld [vmem:[#allocation7 + $0x24] sm:$0xf]
    %v251 = vld [vmem:[#allocation7 + $0x28] sm:$0xf]
    %v252 = vld [vmem:[#allocation7 + $0x2c] sm:$0xf]
    %v253 = vld [vmem:[#allocation7 + $0x30] sm:$0xf]
    %v254 = vld [vmem:[#allocation7 + $0x34] sm:$0xf]
    %v255 = vld [vmem:[#allocation7 + $0x38] sm:$0xf]
    %v256 = vld [vmem:[#allocation7 + $0x3c] sm:$0xf]
    %v257 = vld [vmem:[%s4] sm:$0x1]
    %v259 = vlaneseq
    %v260 = vshrl.u32 %v259, 7
    %v261 = vsub.s32 0, %v260
    %v262 = vrot.slane %v257, %v261
    %v280 = vunpack.c.l.b16 %v241
    %v281 = vunpack.c.l.b16 %v242
    %v282 = vunpack.c.l.b16 %v243
    %v283 = vunpack.c.l.b16 %v244
    %v284 = vunpack.c.l.b16 %v245
    %v285 = vunpack.c.l.b16 %v246
    %v286 = vunpack.c.l.b16 %v247
    %v287 = vunpack.c.l.b16 %v248
    %v288 = vunpack.c.l.b16 %v249
    %v289 = vunpack.c.l.b16 %v250
    %v290 = vunpack.c.l.b16 %v251
    %v291 = vunpack.c.l.b16 %v252
    %v292 = vunpack.c.l.b16 %v253
    %v293 = vunpack.c.l.b16 %v254
    %v294 = vunpack.c.l.b16 %v255
    %v295 = vunpack.c.l.b16 %v256
    %v296 = vpack.c.b16 %v281, %v280
    %v297 = vpack.c.b16 %v283, %v282
    %v298 = vpack.c.b16 %v285, %v284
    %v299 = vpack.c.b16 %v287, %v286
    %v300 = vpack.c.b16 %v289, %v288
    %v301 = vpack.c.b16 %v291, %v290
    %v302 = vpack.c.b16 %v293, %v292
    %v303 = vpack.c.b16 %v295, %v294
    %312 = vmatprep.subr.bf16.mxu0 0
    %313 = vmatpush1.bf16.msra.mxu0 %v303
    %314 = vmatprep.subr.bf16.mxu0 0
    %315 = vmatpush1.bf16.msra.mxu0 %v302
    %316 = vmatprep.subr.bf16.mxu0 0
    %317 = vmatpush1.bf16.msra.mxu0 %v301
    %318 = vmatprep.subr.bf16.mxu0 0
    %319 = vmatpush1.bf16.msra.mxu0 %v300
    %320 = vmatprep.subr.bf16.mxu0 0
    %321 = vmatpush1.bf16.msra.mxu0 %v299
    %322 = vmatprep.subr.bf16.mxu0 0
    %323 = vmatpush1.bf16.msra.mxu0 %v298
    %324 = vmatprep.subr.bf16.mxu0 0
    %325 = vmatpush1.bf16.msra.mxu0 %v297
    %326 = vmatprep.subr.bf16.mxu0 0
    %327 = vmatpush1.bf16.msra.mxu0 %v296
    %328 = vmatprep.subr.bf16.mxu0 0
    %329 = vmatpush2.bf16.msra.mxu0 0
    %330 = vmatprep.subr.bf16.mxu0 0
    %331 = vmatpush2.bf16.msra.mxu0 0
    %332 = vmatprep.subr.bf16.mxu0 0
    %333 = vmatpush2.bf16.msra.mxu0 0
    %334 = vmatprep.subr.bf16.mxu0 0
    %335 = vmatpush2.bf16.msra.mxu0 0
    %336 = vmatprep.subr.bf16.mxu0 0
    %337 = vmatpush2.bf16.msra.mxu0 0
    %338 = vmatprep.subr.bf16.mxu0 0
    %339 = vmatpush2.bf16.msra.mxu0 0
    %340 = vmatprep.subr.bf16.mxu0 0
    %341 = vmatpush2.bf16.msra.mxu0 0
    %342 = vmatprep.subr.bf16.mxu0 0
    %343 = vmatpush2.bf16.msra.mxu0 0
    %344 = vmatprep.mubr.bf16.mxu0 0
    %345 = vmatmul.mubr.bf16.gmra.mxu0 %v240
    %v346 = vpop.f32.mrf.mxu0
    %v347 = vadd.f32 %v262, %v346
    %v348 = vpop.f32.mrf.mxu0
    %v349 = vpop.f32.mrf.mxu0
    %v350 = vpop.f32.mrf.mxu0
    %351 = vdwg.mxu0
    %v352 = vmax.f32 %v347, 0.0
    %v353 = vrot.slane %v352, 4
    %v354 = vadd.f32 %v352, %v353
    %v355 = vrot.slane %v354, 2
    %v356 = vadd.f32 %v354, %v355
    %v357 = vrot.slane %v356, 1
    %v358 = vadd.f32 %v356, %v357
    %v359 = vmul.f32 %v358, %v88
    %v360 = vmul.f32 %v352, %v352
    %v361 = vrot.slane %v360, 4
    %v362 = vadd.f32 %v360, %v361
    %v363 = vrot.slane %v362, 2
    %v364 = vadd.f32 %v362, %v363
    %v365 = vrot.slane %v364, 1
    %v366 = vadd.f32 %v364, %v365
    %v367 = vmul.f32 %v366, %v88
    %v368 = vmul.f32 %v359, %v359
    %v369 = vsub.f32 %v367, %v368
    %v370 = vmax.f32 %v369, 0.0
    %v371 = vsub.f32 %v352, %v359
    %v372 = vadd.f32 %v370, 1e-05
    %v373 = vrsqrt.pop %v372
    %v374 = vmul.f32 %v371, %v373
    %v375 = vpack.c.bf16 %v374, %v374
    %v376 = vld [vmem:[#allocation8] sm:$0xf]
    %v377 = vld [vmem:[#allocation8 + $0x4] sm:$0xf]
    %v378 = vld [vmem:[#allocation8 + $0x8] sm:$0xf]
    %v379 = vld [vmem:[#allocation8 + $0xc] sm:$0xf]
    %v380 = vld [vmem:[#allocation8 + $0x10] sm:$0xf]
    %v381 = vld [vmem:[#allocation8 + $0x14] sm:$0xf]
    %v382 = vld [vmem:[#allocation8 + $0x18] sm:$0xf]
    %v383 = vld [vmem:[#allocation8 + $0x1c] sm:$0xf]
    %v384 = vld [vmem:[#allocation8 + $0x20] sm:$0xf]
    %v385 = vld [vmem:[#allocation8 + $0x24] sm:$0xf]
    %v386 = vld [vmem:[#allocation8 + $0x28] sm:$0xf]
    %v387 = vld [vmem:[#allocation8 + $0x2c] sm:$0xf]
    %v388 = vld [vmem:[#allocation8 + $0x30] sm:$0xf]
    %v389 = vld [vmem:[#allocation8 + $0x34] sm:$0xf]
    %v390 = vld [vmem:[#allocation8 + $0x38] sm:$0xf]
    %v391 = vld [vmem:[#allocation8 + $0x3c] sm:$0xf]
    %v392 = vld [vmem:[%s6] sm:$0x1]
    %v394 = vlaneseq
    %v395 = vshrl.u32 %v394, 7
    %v396 = vsub.s32 0, %v395
    %v397 = vrot.slane %v392, %v396
    %v415 = vunpack.c.l.b16 %v376
    %v416 = vunpack.c.l.b16 %v377
    %v417 = vunpack.c.l.b16 %v378
    %v418 = vunpack.c.l.b16 %v379
    %v419 = vunpack.c.l.b16 %v380
    %v420 = vunpack.c.l.b16 %v381
    %v421 = vunpack.c.l.b16 %v382
    %v422 = vunpack.c.l.b16 %v383
    %v423 = vunpack.c.l.b16 %v384
    %v424 = vunpack.c.l.b16 %v385
    %v425 = vunpack.c.l.b16 %v386
    %v426 = vunpack.c.l.b16 %v387
    %v427 = vunpack.c.l.b16 %v388
    %v428 = vunpack.c.l.b16 %v389
    %v429 = vunpack.c.l.b16 %v390
    %v430 = vunpack.c.l.b16 %v391
    %v431 = vpack.c.b16 %v416, %v415
    %v432 = vpack.c.b16 %v418, %v417
    %v433 = vpack.c.b16 %v420, %v419
    %v434 = vpack.c.b16 %v422, %v421
    %v435 = vpack.c.b16 %v424, %v423
    %v436 = vpack.c.b16 %v426, %v425
    %v437 = vpack.c.b16 %v428, %v427
    %v438 = vpack.c.b16 %v430, %v429
    %447 = vmatprep.subr.bf16.mxu0 0
    %448 = vmatpush1.bf16.msra.mxu0 %v438
    %449 = vmatprep.subr.bf16.mxu0 0
    %450 = vmatpush1.bf16.msra.mxu0 %v437
    %451 = vmatprep.subr.bf16.mxu0 0
    %452 = vmatpush1.bf16.msra.mxu0 %v436
    %453 = vmatprep.subr.bf16.mxu0 0
    %454 = vmatpush1.bf16.msra.mxu0 %v435
    %455 = vmatprep.subr.bf16.mxu0 0
    %456 = vmatpush1.bf16.msra.mxu0 %v434
    %457 = vmatprep.subr.bf16.mxu0 0
    %458 = vmatpush1.bf16.msra.mxu0 %v433
    %459 = vmatprep.subr.bf16.mxu0 0
    %460 = vmatpush1.bf16.msra.mxu0 %v432
    %461 = vmatprep.subr.bf16.mxu0 0
    %462 = vmatpush1.bf16.msra.mxu0 %v431
    %463 = vmatprep.subr.bf16.mxu0 0
    %464 = vmatpush2.bf16.msra.mxu0 0
    %465 = vmatprep.subr.bf16.mxu0 0
    %466 = vmatpush2.bf16.msra.mxu0 0
    %467 = vmatprep.subr.bf16.mxu0 0
    %468 = vmatpush2.bf16.msra.mxu0 0
    %469 = vmatprep.subr.bf16.mxu0 0
    %470 = vmatpush2.bf16.msra.mxu0 0
    %471 = vmatprep.subr.bf16.mxu0 0
    %472 = vmatpush2.bf16.msra.mxu0 0
    %473 = vmatprep.subr.bf16.mxu0 0
    %474 = vmatpush2.bf16.msra.mxu0 0
    %475 = vmatprep.subr.bf16.mxu0 0
    %476 = vmatpush2.bf16.msra.mxu0 0
    %477 = vmatprep.subr.bf16.mxu0 0
    %478 = vmatpush2.bf16.msra.mxu0 0
    %479 = vmatprep.mubr.bf16.mxu0 0
    %480 = vmatmul.mubr.bf16.gmra.mxu0 %v375
    %v481 = vpop.f32.mrf.mxu0
    %v482 = vadd.f32 %v397, %v481
    %v483 = vpop.f32.mrf.mxu0
    %v484 = vpop.f32.mrf.mxu0
    %v485 = vpop.f32.mrf.mxu0
    %486 = vdwg.mxu0
    %v487 = vtanh.pop %v482
    %488 = vst [vmem:[#allocation10] sm:$0xff] %v487
    // Predicated region
    $region46: #{tpu_custom_call.1} parent=1 // pred_check
      _
    $region47: #{tpu_custom_call.1} parent=1 // pred_check_branch
      %490 = sbr.rel (0) target = $region49
    $region48: #{tpu_custom_call.1} parent=1 // pred_region
      %s492 = ssub.s32 128, 128
      %493 = vsyncadd [#allocation4], %s492
      %s495 = sshll.u32 [#allocation10], 4
      %s496 = int_to_ptr.vmem [resolvable:$true] %s495
      %498 = dma.vmem_to_hbm [thread:$0]  %s496, 128, %s7, [#allocation4]
    $region49: #{tpu_custom_call.1} parent=1 // pred_fallthru
      _
    // Predicated region
    $region50: #{tpu_custom_call.1} parent=1 // pred_check
      _
    $region51: #{tpu_custom_call.1} parent=1 // pred_check_branch
      %500 = sbr.rel (0) target = $region53
    $region52: #{tpu_custom_call.1} parent=1 // pred_region
      %501 = dma.done [#allocation4], 128
    $region53: #{tpu_custom_call.1} parent=1 // pred_fallthru
      _
    %502 = vsyncpa [#allocation3], 1
    %503 = vsyncpa [#allocation6], 1
    %504 = vsyncpa [#allocation9], 1
    %505 = vsyncpa [#allocation4], 1

</llo_original>
